<compile_context>
chip_gen: v5e
topology: v5e:2x2
jax: 0.10.0
libtpu: 0.0.40
codegen_flags: <defaults>
</compile_context>

<pallas_src>
import functools

import jax
import jax.numpy as jnp
from jax import lax
from jax.experimental import pallas as pl
from jax.experimental.pallas import tpu as pltpu


# ---------------------------------------------------------------------------
# Sizing helpers
# ---------------------------------------------------------------------------

_DEFAULT_VMEM_CAP = 64 * 1024 * 1024        # conservative (v7x physical VMEM)


def _cdiv(a, b):
    return -(-a // b)


def _vmem_limit_bytes():
    """Scoped-VMEM budget to request: 3/4 of physical, capped at 96 MiB."""
    cap = None
    try:
        cap = getattr(pltpu.get_tpu_info(), "vmem_capacity_bytes", None)
    except Exception:
        cap = None
    if not cap:
        cap = _DEFAULT_VMEM_CAP
    return int(min((int(cap) * 3) // 4, 96 * 1024 * 1024))


def _sublane_multiple(itemsize):
    return {4: 8, 2: 16, 1: 32}.get(int(itemsize), 8)


def _choose_rgb_spatial(H, W):
    """Lane-dense (rows, lanes) factorization of a per-channel plane."""
    if W % 128 == 0:
        return H, W
    n = H * W
    for lw in (1024, 512, 256, 128):
        if n % lw == 0:
            return n // lw, lw
    # TODO(synk): H*W not divisible by 128 -> stores stay lane-masked.
    return H, W


def _pick_row_tile(rows, row_bytes, sub_mult, target_bytes):
    """Largest row tile that is a multiple of sub_mult and fits target_bytes."""
    if rows <= sub_mult:
        return rows
    max_rows = max(sub_mult, target_bytes // max(1, row_bytes))
    th = min(int(max_rows), rows)
    return max(sub_mult, (th // sub_mult) * sub_mult)


# ---------------------------------------------------------------------------
# Fused single-pass gray-world kernels (whole image per block)
# ---------------------------------------------------------------------------

def _rgb_fused_kernel(x_ref, o_ref, *, inv_n):
    """x/o: (1, 3, R, LW). Channel sums -> gains -> apply, one HBM round trip."""
    s0 = jnp.sum(x_ref[0, 0].astype(jnp.float32))
    s1 = jnp.sum(x_ref[0, 1].astype(jnp.float32))
    s2 = jnp.sum(x_ref[0, 2].astype(jnp.float32))
    g_avg = s1 * inv_n
    gains = (g_avg / (s0 * inv_n + 1e-6),
             g_avg / (s1 * inv_n + 1e-6),
             g_avg / (s2 * inv_n + 1e-6))
    for c in range(3):
        o_ref[0, c] = (x_ref[0, c].astype(jnp.float32) * gains[c]).astype(o_ref.dtype)


def _bayer_fused_kernel(x_ref, o_ref, *, H, W):
    """x/o: (1, 1, H, W). RGGB masked sums -> gains -> apply, one pass."""
    x = x_ref[0, 0].astype(jnp.float32)
    row = lax.broadcasted_iota(jnp.int32, x.shape, 0)
    col = lax.broadcasted_iota(jnp.int32, x.shape, 1)
    r_even = (row & 1) == 0
    c_even = (col & 1) == 0
    r_sel = r_even & c_even
    g_sel = r_even != c_even
    b_sel = jnp.logical_not(r_even) & jnp.logical_not(c_even)

    s_r = jnp.sum(jnp.where(r_sel, x, 0.0))
    s_g = jnp.sum(jnp.where(g_sel, x, 0.0))       # direct green sum (no drift)
    s_b = jnp.sum(jnp.where(b_sel, x, 0.0))

    n_r = ((H + 1) // 2) * ((W + 1) // 2)
    n_b = (H // 2) * (W // 2)
    n_g = H * W - n_r - n_b
    g_avg = s_g / n_g
    r_gain = g_avg / (s_r / n_r + 1e-6)
    b_gain = g_avg / (s_b / n_b + 1e-6)

    scale = jnp.where(r_sel, r_gain, jnp.where(b_sel, b_gain, 1.0))
    o_ref[0, 0] = (x * scale).astype(o_ref.dtype)


# ---------------------------------------------------------------------------
# Tiled reduce kernels (gray-world phase 1, large images)
# grid = (B * nsplit, half); output block (1, 1, 3) accumulated over axis 1
# ---------------------------------------------------------------------------

def _rgb_reduce_kernel(x_ref, sums_ref, *, half, tile_rows, total_rows, nsplit):
    g = pl.program_id(0)
    h = pl.program_id(1)

    @pl.when(h == 0)
    def _():
        sums_ref[...] = jnp.zeros_like(sums_ref)

    # Un-clamped global row start; duplicated/clamped tail tiles mask to zero.
    row0 = ((g % nsplit) * half + h) * tile_rows

    def ch_sum(c):
        x = x_ref[0, c].astype(jnp.float32)                    # (TR, LW)
        r = row0 + lax.broadcasted_iota(jnp.int32, x.shape, 0)
        return jnp.sum(jnp.where(r < total_rows, x, 0.0))

    s0, s1, s2 = ch_sum(0), ch_sum(1), ch_sum(2)
    ch = lax.broadcasted_iota(jnp.int32, (1, 1, 3), 2)
    sums_ref[...] += jnp.where(ch == 0, s0, jnp.where(ch == 1, s1, s2))


def _bayer_reduce_kernel(x_ref, sums_ref, *, half, tile_rows, total_rows, nsplit):
    g = pl.program_id(0)
    h = pl.program_id(1)

    @pl.when(h == 0)
    def _():
        sums_ref[...] = jnp.zeros_like(sums_ref)

    row0 = ((g % nsplit) * half + h) * tile_rows
    x = x_ref[0, 0].astype(jnp.float32)                        # (TH, W)
    lrow = lax.broadcasted_iota(jnp.int32, x.shape, 0)
    col = lax.broadcasted_iota(jnp.int32, x.shape, 1)
    x = jnp.where(row0 + lrow < total_rows, x, 0.0)

    # Tile start row is always even, so local parity == global parity.
    r_even = (lrow & 1) == 0
    c_even = (col & 1) == 0
    r_sel = r_even & c_even
    g_sel = r_even != c_even
    b_sel = jnp.logical_not(r_even) & jnp.logical_not(c_even)

    s_r = jnp.sum(jnp.where(r_sel, x, 0.0))
    s_g = jnp.sum(jnp.where(g_sel, x, 0.0))
    s_b = jnp.sum(jnp.where(b_sel, x, 0.0))

    ch = lax.broadcasted_iota(jnp.int32, (1, 1, 3), 2)
    sums_ref[...] += jnp.where(ch == 0, s_r, jnp.where(ch == 1, s_g, s_b))


# ---------------------------------------------------------------------------
# Tiled apply kernels (phase 2 + manual mode): per-image gains in SMEM
# ---------------------------------------------------------------------------

def _rgb_apply_kernel(gains_ref, x_ref, o_ref):
    """gains: SMEM (B, 3) f32; x/o: (1, 3, TR, LW)."""
    b = pl.program_id(0)
    for c in range(3):
        o_ref[0, c] = (x_ref[0, c].astype(jnp.float32)
                       * gains_ref[b, c]).astype(o_ref.dtype)


def _bayer_apply_kernel(gains_ref, x_ref, o_ref):
    """gains: SMEM (B, 3) f32; x/o: (1, 1, TH, W)."""
    b = pl.program_id(0)
    x = x_ref[0, 0].astype(jnp.float32)
    row = lax.broadcasted_iota(jnp.int32, x.shape, 0)
    col = lax.broadcasted_iota(jnp.int32, x.shape, 1)
    r_even = (row & 1) == 0
    c_even = (col & 1) == 0
    r_sel = r_even & c_even
    b_sel = jnp.logical_not(r_even) & jnp.logical_not(c_even)
    scale = jnp.where(r_sel, gains_ref[b, 0],
                      jnp.where(b_sel, gains_ref[b, 2], gains_ref[b, 1]))
    o_ref[0, 0] = (x * scale).astype(o_ref.dtype)


# ---------------------------------------------------------------------------
# pallas_call wrappers
# ---------------------------------------------------------------------------

def _run_fused(kernel_fn, x, vmem_limit):
    B = x.shape[0]
    blk = (1,) + tuple(x.shape[1:])
    n_bytes = 2 * int(x.size) * x.dtype.itemsize
    return pl.pallas_call(
        kernel_fn,
        out_shape=jax.ShapeDtypeStruct(x.shape, x.dtype),
        grid_spec=pltpu.PrefetchScalarGridSpec(
            num_scalar_prefetch=0,
            grid=(B,),
            in_specs=[pl.BlockSpec(blk, lambda b: (b, 0, 0, 0))],
            out_specs=pl.BlockSpec(blk, lambda b: (b, 0, 0, 0)),
        ),
        compiler_params=pltpu.CompilerParams(
            dimension_semantics=("parallel",),
            vmem_limit_bytes=vmem_limit,
        ),
        cost_estimate=pl.CostEstimate(flops=3 * int(x.size), transcendentals=0,
                                      bytes_accessed=n_bytes),
    )(x)


def _run_reduce(kernel_fn, x, tile_rows, vmem_limit):
    """Per-image channel sums -> (B, 3) f32.  Row tiles split across 2 cores."""
    B, C, rows, lanes = x.shape
    n_t = _cdiv(rows, tile_rows)
    nsplit = 2 if n_t >= 2 else 1           # engages both v7x TCs even at B==1
    half = _cdiv(n_t, nsplit)
    kern = functools.partial(kernel_fn, half=half, tile_rows=tile_rows,
                             total_rows=rows, nsplit=nsplit)

    def x_map(g, h):
        blk = (g % nsplit) * half + h
        return (g // nsplit, 0, jnp.minimum(blk, n_t - 1), 0)

    n_bytes = int(x.size) * x.dtype.itemsize
    partials = pl.pallas_call(
        kern,
        out_shape=jax.ShapeDtypeStruct((B * nsplit, 1, 3), jnp.float32),
        grid_spec=pltpu.PrefetchScalarGridSpec(
            num_scalar_prefetch=0,
            grid=(B * nsplit, half),
            in_specs=[pl.BlockSpec((1, C, tile_rows, lanes), x_map)],
            out_specs=pl.BlockSpec((1, 1, 3), lambda g, h: (g, 0, 0)),
        ),
        compiler_params=pltpu.CompilerParams(
            dimension_semantics=("parallel", "arbitrary"),
            vmem_limit_bytes=vmem_limit,
        ),
        cost_estimate=pl.CostEstimate(flops=2 * int(x.size), transcendentals=0,
                                      bytes_accessed=n_bytes),
    )(x)
    return jnp.sum(partials.reshape(B, nsplit, 3), axis=1)      # (B, 3)


def _run_apply(kernel_fn, x, gains, tile_rows, vmem_limit):
    B, C, rows, lanes = x.shape
    n_t = _cdiv(rows, tile_rows)
    n_bytes = 2 * int(x.size) * x.dtype.itemsize
    return pl.pallas_call(
        kernel_fn,
        out_shape=jax.ShapeDtypeStruct(x.shape, x.dtype),
        grid_spec=pltpu.PrefetchScalarGridSpec(
            num_scalar_prefetch=0,
            grid=(B, n_t),
            in_specs=[
                pl.BlockSpec(memory_space=pltpu.MemorySpace.SMEM),   # gains (B, 3)
                pl.BlockSpec((1, C, tile_rows, lanes), lambda b, h: (b, 0, h, 0)),
            ],
            out_specs=pl.BlockSpec((1, C, tile_rows, lanes), lambda b, h: (b, 0, h, 0)),
        ),
        compiler_params=pltpu.CompilerParams(
            dimension_semantics=("parallel", "parallel"),
            vmem_limit_bytes=vmem_limit,
        ),
        cost_estimate=pl.CostEstimate(flops=int(x.size), transcendentals=0,
                                      bytes_accessed=n_bytes),
    )(gains, x)


# ---------------------------------------------------------------------------
# Per-image gain math (tiny (B, 3) XLA ops between the two Pallas passes)
# ---------------------------------------------------------------------------

def _gray_world_gains_rgb(sums, n_px):
    avg = sums / float(n_px)                                    # (B, 3)
    g_avg = avg[:, 1:2]
    return (g_avg / (avg + 1e-6)).astype(jnp.float32)


def _gray_world_gains_bayer(sums, H, W):
    n_r = ((H + 1) // 2) * ((W + 1) // 2)
    n_b = (H // 2) * (W // 2)
    n_g = H * W - n_r - n_b
    r_avg = sums[:, 0] / float(n_r)
    g_avg = sums[:, 1] / float(n_g)
    b_avg = sums[:, 2] / float(n_b)
    return jnp.stack([g_avg / (r_avg + 1e-6),
                      jnp.ones_like(g_avg),
                      g_avg / (b_avg + 1e-6)], axis=-1).astype(jnp.float32)


# ---------------------------------------------------------------------------
# Module-equivalent wrapper
# ---------------------------------------------------------------------------

class AutoWhiteBalancePallas:
    """JAX/Pallas equivalent of deeplens AutoWhiteBalance.forward()."""

    def __init__(self, awb_method="gray_world", gains=(2.0, 1.0, 1.8)):
        self.awb_method = awb_method
        self.gains = tuple(float(g) for g in gains)   # register_buffer equivalent

    def __call__(self, x, *, force_two_pass=False, tile_rows=None):
        if x.ndim != 4:
            raise ValueError("expected [B, C, H, W] input")
        B, C, H, W = x.shape
        if C not in (1, 3):
            raise ValueError("expected 1 (Bayer) or 3 (RGB) channels")

        itemsize = x.dtype.itemsize
        vmem_limit = _vmem_limit_bytes()
        sub_mult = _sublane_multiple(itemsize)

        if C == 3:
            rows, lanes = _choose_rgb_spatial(H, W)     # lane-dense per-channel slab
            x4 = x.reshape(B, 3, rows, lanes)
        else:
            rows, lanes = H, W
            x4 = x

        img_bytes = C * H * W * itemsize
        use_fused = (self.awb_method == "gray_world"
                     and not force_two_pass
                     and 4 * img_bytes + (4 << 20) <= vmem_limit)

        if tile_rows is None:
            tile_rows = _pick_row_tile(rows, C * lanes * itemsize, sub_mult,
                                       vmem_limit // 8)

        if self.awb_method == "gray_world":
            if use_fused:
                if C == 3:
                    kern = functools.partial(_rgb_fused_kernel, inv_n=1.0 / (H * W))
                else:
                    kern = functools.partial(_bayer_fused_kernel, H=H, W=W)
                out = _run_fused(kern, x4, vmem_limit)
                return out.reshape(B, C, H, W)
            if C == 3:
                sums = _run_reduce(_rgb_reduce_kernel, x4, tile_rows, vmem_limit)
                gains = _gray_world_gains_rgb(sums, H * W)
            else:
                sums = _run_reduce(_bayer_reduce_kernel, x4, tile_rows, vmem_limit)
                gains = _gray_world_gains_bayer(sums, H, W)
        elif self.awb_method == "manual":
            gains = jnp.broadcast_to(
                jnp.asarray(self.gains, dtype=jnp.float32)[None, :], (B, 3))
        else:
            raise ValueError(f"Unknown AWB method: {self.awb_method}")

        kern = _bayer_apply_kernel if C == 1 else _rgb_apply_kernel
        out = _run_apply(kern, x4, gains, tile_rows, vmem_limit)
        return out.reshape(B, C, H, W)


# ---------------------------------------------------------------------------
# Pure-JAX references (mirror the PyTorch semantics)
# ---------------------------------------------------------------------------

def _ref_rgb_gray_world(x):
    rgb_avg = jnp.mean(x, axis=(2, 3), keepdims=True)
    g_avg = rgb_avg[:, 1:2, :, :]
    gains = g_avg / (rgb_avg + 1e-6)
    return x * gains


def _bayer_ref_masks(H, W, dtype):
    row = jnp.arange(H)[:, None]
    col = jnp.arange(W)[None, :]
    r_mask = ((row % 2 == 0) & (col % 2 == 0)).astype(dtype)
    g_mask = (((row % 2 == 0) & (col % 2 == 1))
              | ((row % 2 == 1) & (col % 2 == 0))).astype(dtype)
    b_mask = ((row % 2 == 1) & (col % 2 == 1)).astype(dtype)
    return r_mask, g_mask, b_mask


def _ref_bayer_gray_world(x):
    B, _, H, W = x.shape
    r_mask, g_mask, b_mask = _bayer_ref_masks(H, W, x.dtype)
    r_avg = jnp.sum(x * r_mask[None, None], axis=(2, 3)) / jnp.sum(r_mask)
    g_avg = jnp.sum(x * g_mask[None, None], axis=(2, 3)) / jnp.sum(g_mask)
    b_avg = jnp.sum(x * b_mask[None, None], axis=(2, 3)) / jnp.sum(b_mask)
    g_gain = jnp.ones_like(g_avg)
    r_gain = g_avg / (r_avg + 1e-6)
    b_gain = g_avg / (b_avg + 1e-6)
    scale = (r_mask[None, None] * r_gain.reshape(B, 1, 1, 1)
             + g_mask[None, None] * g_gain.reshape(B, 1, 1, 1)
             + b_mask[None, None] * b_gain.reshape(B, 1, 1, 1))
    return x * scale


def _ref_manual(x, gains):
    g = jnp.asarray(gains, dtype=x.dtype)
    if x.shape[1] == 1:
        H, W = x.shape[2], x.shape[3]
        r_mask, g_mask, b_mask = _bayer_ref_masks(H, W, x.dtype)
        return x * (r_mask * g[0] + g_mask * g[1] + b_mask * g[2])[None, None]
    return x * g.reshape(1, 3, 1, 1)


# ---------------------------------------------------------------------------
# Main
# ---------------------------------------------------------------------------

if __name__ == "__main__":
    key = jax.random.PRNGKey(0)
    k1, k2, k3, k4 = jax.random.split(key, 4)

    B, H, W = 2, 16, 16
    x_rgb = jax.random.uniform(k1, (B, 3, H, W), dtype=jnp.float32)
    x_bayer = jax.random.uniform(k2, (B, 1, H, W), dtype=jnp.float32)
    # Small shapes that still exercise the tiled two-pass path (odd tile count,
    # ragged 36-row tail, dual-split reduce, cdiv apply grid).
    x_rgb_t = jax.random.uniform(k3, (B, 3, 36, 128), dtype=jnp.float32)
    x_bayer_t = jax.random.uniform(k4, (B, 1, 36, 128), dtype=jnp.float32)

    awb_gw = AutoWhiteBalancePallas(awb_method="gray_world")
    awb_manual = AutoWhiteBalancePallas(awb_method="manual")

    results = {
        "rgb_gw_fused": (awb_gw(x_rgb), _ref_rgb_gray_world(x_rgb)),
        "bayer_gw_fused": (awb_gw(x_bayer), _ref_bayer_gray_world(x_bayer)),
        "rgb_manual": (awb_manual(x_rgb), _ref_manual(x_rgb, awb_manual.gains)),
        "bayer_manual": (awb_manual(x_bayer), _ref_manual(x_bayer, awb_manual.gains)),
        "rgb_gw_tiled": (awb_gw(x_rgb_t, force_two_pass=True, tile_rows=8),
                         _ref_rgb_gray_world(x_rgb_t)),
        "bayer_gw_tiled": (awb_gw(x_bayer_t, force_two_pass=True, tile_rows=8),
                           _ref_bayer_gray_world(x_bayer_t)),
    }
    for name, (out, _) in results.items():
        jax.block_until_ready(out)

    for name, (out, ref) in results.items():
        assert out.shape == ref.shape, name
        assert jnp.allclose(out, ref, atol=1e-5, rtol=1e-5), name

    print("KERNEL_OK")
</pallas_src>

<mosaic_0001>
module attributes {stable_mosaic.version = 11 : i64} {
  func.func @_rgb_fused_kernel(%arg0: i32, %arg1: memref<1x3x1x256xf32, #tpu.memory_space<vmem>>, %arg2: memref<1x3x1x256xf32, #tpu.memory_space<vmem>>) attributes {dimension_semantics = [#tpu.dimension_semantics<parallel>], iteration_bounds = array<i64: 2>, scalar_prefetch = 0 : i64, scratch_operands = 0 : i64, tpu.core_type = #tpu.core_type<tc>, window_params = [{transform_indices = @transform_0, window_bounds = array<i64: 1, 3, 1, 256>}, {transform_indices = @transform_1, window_bounds = array<i64: 1, 3, 1, 256>}]} {
    %c0 = arith.constant 0 : index
    %c0_0 = arith.constant 0 : index
    %c0_1 = arith.constant 0 : index
    %c0_2 = arith.constant 0 : index
    %0 = vector.load %arg1[%c0, %c0_0, %c0_1, %c0_2] : memref<1x3x1x256xf32, #tpu.memory_space<vmem>>, vector<1x1x1x256xf32>
    %1 = vector.shape_cast %0 : vector<1x1x1x256xf32> to vector<1x256xf32>
    %2 = vector.shape_cast %1 : vector<1x256xf32> to vector<1x1x256xf32>
    %cst = arith.constant dense<0.000000e+00> : vector<1xf32>
    %3 = vector.multi_reduction <add>, %2, %cst [1, 2] : vector<1x1x256xf32> to vector<1xf32>
    %4 = vector.shape_cast %3 : vector<1xf32> to vector<1x1x1xf32>
    %5 = vector.extract %4[0, 0, 0] : f32 from vector<1x1x1xf32>
    %c0_3 = arith.constant 0 : index
    %c1 = arith.constant 1 : index
    %c0_4 = arith.constant 0 : index
    %c0_5 = arith.constant 0 : index
    %6 = vector.load %arg1[%c0_3, %c1, %c0_4, %c0_5] : memref<1x3x1x256xf32, #tpu.memory_space<vmem>>, vector<1x1x1x256xf32>
    %7 = vector.shape_cast %6 : vector<1x1x1x256xf32> to vector<1x256xf32>
    %8 = vector.shape_cast %7 : vector<1x256xf32> to vector<1x1x256xf32>
    %cst_6 = arith.constant dense<0.000000e+00> : vector<1xf32>
    %9 = vector.multi_reduction <add>, %8, %cst_6 [1, 2] : vector<1x1x256xf32> to vector<1xf32>
    %10 = vector.shape_cast %9 : vector<1xf32> to vector<1x1x1xf32>
    %11 = vector.extract %10[0, 0, 0] : f32 from vector<1x1x1xf32>
    %c0_7 = arith.constant 0 : index
    %c2 = arith.constant 2 : index
    %c0_8 = arith.constant 0 : index
    %c0_9 = arith.constant 0 : index
    %12 = vector.load %arg1[%c0_7, %c2, %c0_8, %c0_9] : memref<1x3x1x256xf32, #tpu.memory_space<vmem>>, vector<1x1x1x256xf32>
    %13 = vector.shape_cast %12 : vector<1x1x1x256xf32> to vector<1x256xf32>
    %14 = vector.shape_cast %13 : vector<1x256xf32> to vector<1x1x256xf32>
    %cst_10 = arith.constant dense<0.000000e+00> : vector<1xf32>
    %15 = vector.multi_reduction <add>, %14, %cst_10 [1, 2] : vector<1x1x256xf32> to vector<1xf32>
    %16 = vector.shape_cast %15 : vector<1xf32> to vector<1x1x1xf32>
    %17 = vector.extract %16[0, 0, 0] : f32 from vector<1x1x1xf32>
    %cst_11 = arith.constant 3.906250e-03 : f32
    %18 = arith.mulf %11, %cst_11 : f32
    %cst_12 = arith.constant 3.906250e-03 : f32
    %19 = arith.mulf %5, %cst_12 : f32
    %cst_13 = arith.constant 9.99999997E-7 : f32
    %20 = arith.addf %19, %cst_13 : f32
    %21 = arith.divf %18, %20 : f32
    %cst_14 = arith.constant 3.906250e-03 : f32
    %22 = arith.mulf %11, %cst_14 : f32
    %cst_15 = arith.constant 9.99999997E-7 : f32
    %23 = arith.addf %22, %cst_15 : f32
    %24 = arith.divf %18, %23 : f32
    %cst_16 = arith.constant 3.906250e-03 : f32
    %25 = arith.mulf %17, %cst_16 : f32
    %cst_17 = arith.constant 9.99999997E-7 : f32
    %26 = arith.addf %25, %cst_17 : f32
    %27 = arith.divf %18, %26 : f32
    %c0_18 = arith.constant 0 : index
    %c0_19 = arith.constant 0 : index
    %c0_20 = arith.constant 0 : index
    %c0_21 = arith.constant 0 : index
    %28 = vector.load %arg1[%c0_18, %c0_19, %c0_20, %c0_21] : memref<1x3x1x256xf32, #tpu.memory_space<vmem>>, vector<1x1x1x256xf32>
    %29 = vector.shape_cast %28 : vector<1x1x1x256xf32> to vector<1x256xf32>
    %30 = vector.broadcast %21 : f32 to vector<1x256xf32>
    %31 = arith.mulf %29, %30 : vector<1x256xf32>
    %c0_22 = arith.constant 0 : index
    %c0_23 = arith.constant 0 : index
    %c0_24 = arith.constant 0 : index
    %c0_25 = arith.constant 0 : index
    %32 = vector.load %arg2[%c0_22, %c0_23, %c0_24, %c0_25] : memref<1x3x1x256xf32, #tpu.memory_space<vmem>>, vector<1x1x1x256xf32>
    %33 = vector.shape_cast %32 : vector<1x1x1x256xf32> to vector<1x256xf32>
    %34 = vector.shape_cast %31 : vector<1x256xf32> to vector<1x1x1x256xf32>
    tpu.vector_store %arg2[%c0_22, %c0_23, %c0_24, %c0_25], %34 {strides = array<i32>} : memref<1x3x1x256xf32, #tpu.memory_space<vmem>>, vector<1x1x1x256xf32>,
    %c0_26 = arith.constant 0 : index
    %c1_27 = arith.constant 1 : index
    %c0_28 = arith.constant 0 : index
    %c0_29 = arith.constant 0 : index
    %35 = vector.load %arg1[%c0_26, %c1_27, %c0_28, %c0_29] : memref<1x3x1x256xf32, #tpu.memory_space<vmem>>, vector<1x1x1x256xf32>
    %36 = vector.shape_cast %35 : vector<1x1x1x256xf32> to vector<1x256xf32>
    %37 = vector.broadcast %24 : f32 to vector<1x256xf32>
    %38 = arith.mulf %36, %37 : vector<1x256xf32>
    %c0_30 = arith.constant 0 : index
    %c1_31 = arith.constant 1 : index
    %c0_32 = arith.constant 0 : index
    %c0_33 = arith.constant 0 : index
    %39 = vector.load %arg2[%c0_30, %c1_31, %c0_32, %c0_33] : memref<1x3x1x256xf32, #tpu.memory_space<vmem>>, vector<1x1x1x256xf32>
    %40 = vector.shape_cast %39 : vector<1x1x1x256xf32> to vector<1x256xf32>
    %41 = vector.shape_cast %38 : vector<1x256xf32> to vector<1x1x1x256xf32>
    tpu.vector_store %arg2[%c0_30, %c1_31, %c0_32, %c0_33], %41 {strides = array<i32>} : memref<1x3x1x256xf32, #tpu.memory_space<vmem>>, vector<1x1x1x256xf32>,
    %c0_34 = arith.constant 0 : index
    %c2_35 = arith.constant 2 : index
    %c0_36 = arith.constant 0 : index
    %c0_37 = arith.constant 0 : index
    %42 = vector.load %arg1[%c0_34, %c2_35, %c0_36, %c0_37] : memref<1x3x1x256xf32, #tpu.memory_space<vmem>>, vector<1x1x1x256xf32>
    %43 = vector.shape_cast %42 : vector<1x1x1x256xf32> to vector<1x256xf32>
    %44 = vector.broadcast %27 : f32 to vector<1x256xf32>
    %45 = arith.mulf %43, %44 : vector<1x256xf32>
    %c0_38 = arith.constant 0 : index
    %c2_39 = arith.constant 2 : index
    %c0_40 = arith.constant 0 : index
    %c0_41 = arith.constant 0 : index
    %46 = vector.load %arg2[%c0_38, %c2_39, %c0_40, %c0_41] : memref<1x3x1x256xf32, #tpu.memory_space<vmem>>, vector<1x1x1x256xf32>
    %47 = vector.shape_cast %46 : vector<1x1x1x256xf32> to vector<1x256xf32>
    %48 = vector.shape_cast %45 : vector<1x256xf32> to vector<1x1x1x256xf32>
    tpu.vector_store %arg2[%c0_38, %c2_39, %c0_40, %c0_41], %48 {strides = array<i32>} : memref<1x3x1x256xf32, #tpu.memory_space<vmem>>, vector<1x1x1x256xf32>,
    return
  }
  func.func @transform_0(%arg0: i32) -> (i32, i32, i32, i32) {
    %c0_i32 = arith.constant 0 : i32
    %c0_i32_0 = arith.constant 0 : i32
    %c0_i32_1 = arith.constant 0 : i32
    %c0_i32_2 = arith.constant 0 : i32
    return %arg0, %c0_i32, %c0_i32_0, %c0_i32_1 : i32, i32, i32, i32
  }
  func.func @transform_1(%arg0: i32) -> (i32, i32, i32, i32) {
    %c0_i32 = arith.constant 0 : i32
    %c0_i32_0 = arith.constant 0 : i32
    %c0_i32_1 = arith.constant 0 : i32
    %c0_i32_2 = arith.constant 0 : i32
    return %arg0, %c0_i32, %c0_i32_0, %c0_i32_1 : i32, i32, i32, i32
  }
}

</mosaic_0001>

<llo_original>
// kernel: tpu_custom_call.1
$region0: #{tpu_custom_call.1}
  #allocation0 [shape = 'u32[]', space=smem, size = 0x4, offset = 0x4, fixed_abs, tag = 'smem constant byte address 0x4 - core index']
  #allocation1 [shape = 'u32[72,128]{1,0:T(1,128)}', space=vmem, size = 0x9000, scoped, tag = 'internal scratch']
  %s0 = inlined_call_operand.hbm [shape: f32[2,3,1,256], index: 0, kind: input, shape index: {}]
  %s1 = inlined_call_operand.hbm [shape: f32[2,3,1,256], index: 1, kind: output, shape index: {}]
  %s2 = sld [smem:[#allocation0]]
  $region41: #{tpu_custom_call.1} parent=0
    _
  %s4 = ssub.s32 1, %s2
  %s5 = scalar_select 0, %s4, %s2
  $region1: #{tpu_custom_call.1} parent=0
    #allocation2 [shape = 'u8[6144]{0}', space=vmem, size = 0x1800, scoped, tag = 'input window, operand 0']
    #allocation3 [shape = 's32[2]{0}', space=sflag, size = 0x8, scoped, tag = 'scoped memory for tpu_custom_call.1']
    #allocation4 [shape = 's32[2]{0}', space=sflag, size = 0x8, scoped, tag = 'scoped memory for tpu_custom_call.1']
    #allocation5 [shape = 'u8[6144]{0}', space=vmem, size = 0x1800, scoped, tag = 'output window, operand 0']
    %6 = vsyncpa [#allocation3], 0
    %s7 = scalar_lea.sflag [#allocation3], 1
    %8 = vsyncpa %s7, 0
    %9 = vsyncpa [#allocation4], 0
    %s10 = scalar_lea.sflag [#allocation4], 1
    %11 = vsyncpa %s10, 0
    loop: start=0, step=1, limit=4
    $region2: #{tpu_custom_call.1} parent=1 // loop_pre_header
      _
    $region3: #{tpu_custom_call.1} parent=1 // loop_header
      %s13 = sphi 0, %s17
      %p14 = scmp.ge.s32.totalorder %s13, 4
      %s23 = sphi 0, %s25
      %s26 = sphi 0, %s23
      %s27 = sphi 0, %s26
      %s43 = sphi 0, %s27
      %s49 = sphi 0, %s51
      %s52 = sphi 0, %s49
      %s53 = sphi 0, %s52
      %s69 = sphi 0, %s53
    $region4: #{tpu_custom_call.1} parent=1 // loop_header_branch
      %16 = sbr.rel (%p14) target = $region8
    $region5: #{tpu_custom_call.1} parent=1 // loop_body
      %s18 = ssub.s32 %s13, 1
      %s19 = ssub.s32 %s13, 2
      %s20 = sadd.s32 %s13, 1
      %s21 = ssub.s32 %s13, %s20
      %p22 = scmp.eq.s32.totalorder %s21, 0
      %s24 = sadd.s32 %s23, 1
      %s25 = scalar_select %p22, %s23, %s24
      %p28 = pneg %p22
      %p29 = scmp.eq.s32.totalorder %s13, 1
      %p30 = por %p28, %p29
      %p31 = scmp.ne.s32.totalorder %s23, %s26
      %p32 = scmp.eq.s32.totalorder %s13, 0
      %p33 = por %p31, %p32
      %p34 = scmp.ne.s32.totalorder %s23, %s26
      %p35 = scmp.eq.s32.totalorder %s18, 1
      %p36 = por %p34, %p35
      %p37 = scmp.ne.s32.totalorder %s26, %s27
      %p38 = scmp.eq.s32.totalorder %s18, 0
      %p39 = por %p37, %p38
      %p40 = scmp.ne.s32.totalorder %s26, %s27
      %p41 = scmp.eq.s32.totalorder %s19, 1
      %p42 = por %p40, %p41
      %p44 = scmp.ne.s32.totalorder %s27, %s43
      %p45 = scmp.eq.s32.totalorder %s19, 0
      %p46 = por %p44, %p45
      %s47 = ssub.s32 %s13, %s20
      %p48 = scmp.eq.s32.totalorder %s47, 0
      %s50 = sadd.s32 %s49, 1
      %s51 = scalar_select %p48, %s49, %s50
      %p54 = pneg %p48
      %p55 = scmp.eq.s32.totalorder %s13, 1
      %p56 = por %p54, %p55
      %p57 = scmp.ne.s32.totalorder %s49, %s52
      %p58 = scmp.eq.s32.totalorder %s13, 0
      %p59 = por %p57, %p58
      %p60 = scmp.ne.s32.totalorder %s49, %s52
      %p61 = scmp.eq.s32.totalorder %s18, 1
      %p62 = por %p60, %p61
      %p63 = scmp.ne.s32.totalorder %s52, %s53
      %p64 = scmp.eq.s32.totalorder %s18, 0
      %p65 = por %p63, %p64
      %p66 = scmp.ne.s32.totalorder %s52, %s53
      %p67 = scmp.eq.s32.totalorder %s19, 1
      %p68 = por %p66, %p67
      %p70 = scmp.ne.s32.totalorder %s53, %s69
      %p71 = scmp.eq.s32.totalorder %s19, 0
      %p72 = por %p70, %p71
      %p73 = scmp.le.s32.totalorder 1, %s13
      %p74 = scmp.lt.s32.totalorder %s13, 3
      %p75 = pnand %p73, %p74
      %p76 = pneg %p75
      // Predicated region
      $region9: #{tpu_custom_call.1} parent=5 // pred_check
        _
      $region10: #{tpu_custom_call.1} parent=5 // pred_check_branch
        %78 = sbr.rel (%p75) target = $region12
      $region11: #{tpu_custom_call.1} parent=5 // pred_region
        %s79 = ssub.s32 %s13, 1
      $region12: #{tpu_custom_call.1} parent=5 // pred_fallthru
        _
      %p80 = scmp.lt.s32.totalorder %s13, 2
      // Predicated region
      $region13: #{tpu_custom_call.1} parent=5 // pred_check
        %p81 = pneg %p80
      $region14: #{tpu_custom_call.1} parent=5 // pred_check_branch
        %83 = sbr.rel (%p81) target = $region16
      $region15: #{tpu_custom_call.1} parent=5 // pred_region
        // Predicated region
        $region17: #{tpu_custom_call.1} parent=15 // pred_check
          %p84 = pneg %p33
        $region18: #{tpu_custom_call.1} parent=15 // pred_check_branch
          %86 = sbr.rel (%p84) target = $region20
        $region19: #{tpu_custom_call.1} parent=15 // pred_region
          %s87 = sand.u32 %s23, 1
          %s88 = scalar_lea.sflag [#allocation3], %s87
          %s89 = sand.u32 %s23, 1
          %s90 = smul.addr %s89, 6
          %s91 = scalar_lea.vmem [#allocation2], %s90
          %93 = vsyncadd %s88, 0
          %s94 = smul.addr %s13, 6
          %s95 = scalar_lea.hbm %s0, %s94
          %s96 = sshll.u32 %s95, 4
          %s97 = int_to_ptr.hbm [resolvable:$true] %s96
          %s98 = sshll.u32 %s91, 4
          %s99 = int_to_ptr.vmem [resolvable:$true] %s98
          %104 = dma.hbm_to_vmem [thread:$0]  %s97, 96, %s99, %s88, 32, 32, 2
        $region20: #{tpu_custom_call.1} parent=15 // pred_fallthru
          _
      $region16: #{tpu_custom_call.1} parent=5 // pred_fallthru
        _
      %p105 = scmp.le.s32.totalorder 1, %s13
      %p106 = scmp.lt.s32.totalorder %s13, 3
      %p107 = pnand %p105, %p106
      %p108 = pneg %p107
      // Predicated region
      $region21: #{tpu_custom_call.1} parent=5 // pred_check
        _
      $region22: #{tpu_custom_call.1} parent=5 // pred_check_branch
        %110 = sbr.rel (%p107) target = $region24
      $region23: #{tpu_custom_call.1} parent=5 // pred_region
        %s111 = ssub.s32 %s13, 1
        %s112 = sand.u32 %s26, 1
        %s113 = scalar_lea.sflag [#allocation3], %s112
        %s114 = sand.u32 %s26, 1
        %s115 = smul.addr %s114, 6
        %s116 = scalar_lea.vmem [#allocation2], %s115
        // Predicated region
        $region25: #{tpu_custom_call.1} parent=23 // pred_check
          %p117 = pneg %p39
        $region26: #{tpu_custom_call.1} parent=23 // pred_check_branch
          %119 = sbr.rel (%p117) target = $region28
        $region27: #{tpu_custom_call.1} parent=23 // pred_region
          %121 = dma.done %s113, 96
        $region28: #{tpu_custom_call.1} parent=23 // pred_fallthru
          _
        %s122 = sand.u32 %s26, 1
        %s123 = scalar_lea.sflag [#allocation3], %s122
        %s124 = sand.u32 %s26, 1
        %s125 = smul.addr %s124, 6
        %s126 = scalar_lea.vmem [#allocation2], %s125
        %p127 = pneg %p39
        %p128 = pneg %p36
        %p129 = pneg %p65
        %p130 = pneg %p62
        %s131 = sand.u32 %s52, 1
        %s132 = scalar_lea.sflag [#allocation4], %s131
        %s133 = sand.u32 %s52, 1
        %s134 = smul.addr %s133, 6
        %s135 = scalar_lea.vmem [#allocation5], %s134
        %v136 = vld [vmem:[%s116] sm:$0x3]
        %v138 = vperm.slane %v136, 0
        %v139 = vperm.slane %v136, 1
        %vm142 = vcmask 1040384
        %v143 = vsel %vm142, %v138, 0.0
        %v144 = vsel %vm142, %v139, 0.0
        %v145 = vadd.f32 %v143, %v144
        %146 = vadd.xlane.f32.xlu0 %v145
        %v147 = vpop.xlane.xlu0 %146
        %v148 = vrot.slane %v147, 4
        %v149 = vadd.f32 %v147, %v148
        %v150 = vrot.slane %v149, 2
        %v151 = vadd.f32 %v149, %v150
        %v152 = vrot.slane %v151, 1
        %v153 = vadd.f32 %v151, %v152
        %s154 = vtos %v153
        %s155 = scalar_lea.vmem %s116, 2 [#allocation2]
        %v156 = vld [vmem:[%s155] sm:$0x3]
        %v158 = vperm.slane %v156, 0
        %v159 = vperm.slane %v156, 1
        %v162 = vsel %vm142, %v158, 0.0
        %v163 = vsel %vm142, %v159, 0.0
        %v164 = vadd.f32 %v162, %v163
        %165 = vadd.xlane.f32.xlu0 %v164
        %v166 = vpop.xlane.xlu0 %165
        %v167 = vrot.slane %v166, 4
        %v168 = vadd.f32 %v166, %v167
        %v169 = vrot.slane %v168, 2
        %v170 = vadd.f32 %v168, %v169
        %v171 = vrot.slane %v170, 1
        %v172 = vadd.f32 %v170, %v171
        %s173 = vtos %v172
        %s174 = scalar_lea.vmem %s116, 4 [#allocation2]
        %v175 = vld [vmem:[%s174] sm:$0x3]
        %v177 = vperm.slane %v175, 0
        %v178 = vperm.slane %v175, 1
        %v181 = vsel %vm142, %v177, 0.0
        %v182 = vsel %vm142, %v178, 0.0
        %v183 = vadd.f32 %v181, %v182
        %184 = vadd.xlane.f32.xlu0 %v183
        %v185 = vpop.xlane.xlu0 %184
        %v186 = vrot.slane %v185, 4
        %v187 = vadd.f32 %v185, %v186
        %v188 = vrot.slane %v187, 2
        %v189 = vadd.f32 %v187, %v188
        %v190 = vrot.slane %v189, 1
        %v191 = vadd.f32 %v189, %v190
        %s192 = vtos %v191
        %s193 = smul.f32 %s173, 0.00390625
        %s194 = smul.f32 %s154, 0.00390625
        %s195 = sadd.f32 %s194, 1e-06
        %v196 = vstv %s195
        %v197 = vrcp.pop %v196
        %v198 = vmul.f32 %v196, %v197
        %v199 = vsub.f32 1.0, %v198
        %v200 = vmul.f32 %v197, %v199
        %v201 = vadd.f32 %v197, %v200
        %vm202 = vweird.f32 %v196
        %vm203 = vweird.f32 %v197
        %vm204 = vmor %vm202, %vm203
        %v205 = vsel %vm204, %v197, %v201
        %v206 = vand.u32 2147483647, %v196
        %vm207 = vcmp.eq.f32.partialorder %v206, 8.507059e+37
        %v208 = vand.u32 %v196, 2147483648
        %v209 = vor.u32 1.1754944e-38, %v208
        %v210 = vsel %vm207, %v209, %v205
        %s211 = vtos %v210
        %s212 = smul.f32 %s193, %s211
        %s213 = sadd.f32 %s193, 1e-06
        %v214 = vstv %s213
        %v215 = vrcp.pop %v214
        %v216 = vmul.f32 %v214, %v215
        %v217 = vsub.f32 1.0, %v216
        %v218 = vmul.f32 %v215, %v217
        %v219 = vadd.f32 %v215, %v218
        %vm220 = vweird.f32 %v214
        %vm221 = vweird.f32 %v215
        %vm222 = vmor %vm220, %vm221
        %v223 = vsel %vm222, %v215, %v219
        %v224 = vand.u32 2147483647, %v214
        %vm225 = vcmp.eq.f32.partialorder %v224, 8.507059e+37
        %v226 = vand.u32 %v214, 2147483648
        %v227 = vor.u32 1.1754944e-38, %v226
        %v228 = vsel %vm225, %v227, %v223
        %s229 = vtos %v228
        %s230 = smul.f32 %s193, %s229
        %s231 = smul.f32 %s192, 0.00390625
        %s232 = sadd.f32 %s231, 1e-06
        %v233 = vstv %s232
        %v234 = vrcp.pop %v233
        %v235 = vmul.f32 %v233, %v234
        %v236 = vsub.f32 1.0, %v235
        %v237 = vmul.f32 %v234, %v236
        %v238 = vadd.f32 %v234, %v237
        %vm239 = vweird.f32 %v233
        %vm240 = vweird.f32 %v234
        %vm241 = vmor %vm239, %vm240
        %v242 = vsel %vm241, %v234, %v238
        %v243 = vand.u32 2147483647, %v233
        %vm244 = vcmp.eq.f32.partialorder %v243, 8.507059e+37
        %v245 = vand.u32 %v233, 2147483648
        %v246 = vor.u32 1.1754944e-38, %v245
        %v247 = vsel %vm244, %v246, %v242
        %s248 = vtos %v247
        %s249 = smul.f32 %s193, %s248
        %v250 = vstv %s212
        %v251 = vmul.f32 %v136, %v250
        %v252 = vlaneseq
        %vm253 = vcmp.ge.s32.totalorder %v252, 0
        %vm254 = vcmp.lt.s32.totalorder %v252, 256
        %vm255 = vmand %vm253, %vm254
        %256 = vst.msk [vmem:[%s135] sm:$0x3] %vm255, %v251
        %v257 = vld [vmem:[%s155] sm:$0x3]
        %v258 = vstv %s230
        %v259 = vmul.f32 %v257, %v258
        %s260 = scalar_lea.vmem %s135, 2 [#allocation5]
        %261 = vst.msk [vmem:[%s260] sm:$0x3] %vm255, %v259
        %v262 = vld [vmem:[%s174] sm:$0x3]
        %v263 = vstv %s249
        %v264 = vmul.f32 %v262, %v263
        %s265 = scalar_lea.vmem %s135, 4 [#allocation5]
        %266 = vst.msk [vmem:[%s265] sm:$0x3] %vm255, %v264
        %s267 = sand.u32 %s52, 1
        %s268 = scalar_lea.sflag [#allocation4], %s267
        %s269 = sand.u32 %s52, 1
        %s270 = smul.addr %s269, 6
        %s271 = scalar_lea.vmem [#allocation5], %s270
        // Predicated region
        $region29: #{tpu_custom_call.1} parent=23 // pred_check
          %p272 = pneg %p62
        $region30: #{tpu_custom_call.1} parent=23 // pred_check_branch
          %274 = sbr.rel (%p272) target = $region32
        $region31: #{tpu_custom_call.1} parent=23 // pred_region
          %276 = vsyncadd %s268, 0
          %s277 = smul.addr %s18, 6
          %s278 = scalar_lea.hbm %s1, %s277
          %s279 = sshll.u32 %s271, 4
          %s280 = int_to_ptr.vmem [resolvable:$true] %s279
          %s281 = sshll.u32 %s278, 4
          %s282 = int_to_ptr.hbm [resolvable:$true] %s281
          %287 = dma.vmem_to_hbm [thread:$0]  %s280, 96, %s282, %s268, 32, 32, 2
        $region32: #{tpu_custom_call.1} parent=23 // pred_fallthru
          _
      $region24: #{tpu_custom_call.1} parent=5 // pred_fallthru
        _
      %p288 = scmp.le.s32.totalorder 2, %s13
      // Predicated region
      $region33: #{tpu_custom_call.1} parent=5 // pred_check
        %p289 = pneg %p288
      $region34: #{tpu_custom_call.1} parent=5 // pred_check_branch
        %291 = sbr.rel (%p289) target = $region36
      $region35: #{tpu_custom_call.1} parent=5 // pred_region
        %s292 = ssub.s32 %s13, 2
        // Predicated region
        $region37: #{tpu_custom_call.1} parent=35 // pred_check
          %p293 = pneg %p68
        $region38: #{tpu_custom_call.1} parent=35 // pred_check_branch
          %295 = sbr.rel (%p293) target = $region40
        $region39: #{tpu_custom_call.1} parent=35 // pred_region
          %s296 = sand.u32 %s53, 1
          %s297 = scalar_lea.sflag [#allocation4], %s296
          %s298 = sand.u32 %s53, 1
          %s299 = smul.addr %s298, 6
          %s300 = scalar_lea.vmem [#allocation5], %s299
          %302 = dma.done %s297, 96
        $region40: #{tpu_custom_call.1} parent=35 // pred_fallthru
          _
      $region36: #{tpu_custom_call.1} parent=5 // pred_fallthru
        _
    $region6: #{tpu_custom_call.1} parent=1 // loop_footer
      %s17 = sadd.s32 1, %s13
    $region7: #{tpu_custom_call.1} parent=1 // loop_footer_branch
      %12 = sbr.rel target = $region3
    $region8: #{tpu_custom_call.1} parent=1 // loop_exit
      _
    %303 = vsyncpa [#allocation3], 1
    %s304 = scalar_lea.sflag [#allocation3], 1
    %305 = vsyncpa %s304, 1
    %306 = vsyncpa [#allocation4], 1
    %s307 = scalar_lea.sflag [#allocation4], 1
    %308 = vsyncpa %s307, 1

</llo_original>
